<compile_context>
chip_gen: v7x
topology: tpu7x:2x2x1
jax: 0.10.0
libtpu: 0.0.40
codegen_flags: <defaults>
</compile_context>

<pallas_src>
import numpy as np
import jax
import jax.numpy as jnp
from jax import lax
from jax.experimental import pallas as pl
from jax.experimental.pallas import tpu as pltpu


def _round_up(x, m):
    return (x + m - 1) // m * m


def _physical_vmem_bytes():
    """Per-core VMEM capacity (v5e/v6e: 128 MiB, v7x: 64 MiB)."""
    try:
        return int(pltpu.get_tpu_info().vmem_capacity_bytes)
    except Exception:
        pass
    try:
        kind = jax.devices()[0].device_kind.lower()
    except Exception:
        kind = ""
    return (64 << 20) if "v7" in kind else (128 << 20)


# ---------------------------------------------------------------------------
# Kernels
# ---------------------------------------------------------------------------

_GELU_C = 0.7978845608028654  # sqrt(2/pi)


def _gelu_tanh(h):
    # inner = c*h*(1 + 0.044715*h*h)  (one VPU mul fewer than c*(h + a*h^3))
    inner = _GELU_C * h * (1.0 + 0.044715 * (h * h))
    return 0.5 * h * (1.0 + jnp.tanh(inner))


def _mlp_kernel_resident(x_ref, w1_ref, b1_ref, w2_ref, b2_ref, bn_ref, o_ref):
    """Both weight matrices VMEM-resident; 1-D grid over rows."""
    bn = bn_ref[...]                                   # (tm, 4) f32 packed
    s1, t1 = bn[:, 0:1], bn[:, 1:2]
    s2, t2 = bn[:, 2:3], bn[:, 3:4]

    h = jnp.dot(x_ref[...], w1_ref[...], preferred_element_type=jnp.float32)
    h = (h + b1_ref[...]) * s1 + t1                    # fc1 bias + BN1 (eval)
    h = _gelu_tanh(h)                                  # GELU; Dropout = id (eval)

    y = jnp.dot(h.astype(w2_ref.dtype), w2_ref[...],
                preferred_element_type=jnp.float32)
    y = (y + b2_ref[...]) * s2 + t2                    # fc2 bias + BN2 (eval)
    o_ref[...] = y.astype(o_ref.dtype)


def _mlp_kernel_htiled(x_ref, w1_ref, b1_ref, w2_ref, b2_ref, bn_ref, o_ref,
                       acc_ref):
    """Hidden-dim tiled variant: fc1 N-tiled, fc2 K-reduction into f32 acc."""
    j = pl.program_id(1)
    bn = bn_ref[...]
    s1, t1 = bn[:, 0:1], bn[:, 1:2]

    h = jnp.dot(x_ref[...], w1_ref[...], preferred_element_type=jnp.float32)
    h = (h + b1_ref[...]) * s1 + t1
    h = _gelu_tanh(h)
    part = jnp.dot(h.astype(w2_ref.dtype), w2_ref[...],
                   preferred_element_type=jnp.float32)

    @pl.when(j == 0)
    def _():
        acc_ref[...] = jnp.zeros_like(acc_ref)

    acc_ref[...] += part

    @pl.when(j == pl.num_programs(1) - 1)
    def _():
        s2, t2 = bn[:, 2:3], bn[:, 3:4]
        y = (acc_ref[...] + b2_ref[...]) * s2 + t2
        o_ref[...] = y.astype(o_ref.dtype)


# ---------------------------------------------------------------------------
# pallas_call builders
# ---------------------------------------------------------------------------

def _cost(M, Kp, Hp, Fp, out_itemsize):
    return pl.CostEstimate(
        flops=2 * M * (Kp * Hp + Hp * Fp),
        transcendentals=M * Hp,
        bytes_accessed=(M * Kp * 2 + (Kp * Hp + Hp * Fp) * 2
                        + M * 4 * 4 + M * Fp * out_itemsize),
    )


def _resident_call(x_rows, w1, b1, w2, b2, bn_rows, *, tm, out_dtype,
                   vmem_limit, single_buffer_weights):
    M, Kp = x_rows.shape
    Hp, Fp = w1.shape[1], w2.shape[1]
    if single_buffer_weights:
        # Constant-index operands: a single VMEM copy is enough.
        wkw = dict(pipeline_mode=pl.Buffered(1))
    else:
        wkw = {}
    return pl.pallas_call(
        _mlp_kernel_resident,
        out_shape=jax.ShapeDtypeStruct((M, Fp), out_dtype),
        grid=(pl.cdiv(M, tm),),
        in_specs=[
            pl.BlockSpec((tm, Kp), lambda i: (i, 0)),          # x rows
            pl.BlockSpec((Kp, Hp), lambda i: (0, 0), **wkw),   # W1 resident
            pl.BlockSpec((1, Hp), lambda i: (0, 0), **wkw),    # b1
            pl.BlockSpec((Hp, Fp), lambda i: (0, 0), **wkw),   # W2 resident
            pl.BlockSpec((1, Fp), lambda i: (0, 0), **wkw),    # b2
            pl.BlockSpec((tm, 4), lambda i: (i, 0)),           # packed BN affine
        ],
        out_specs=pl.BlockSpec((tm, Fp), lambda i: (i, 0)),
        compiler_params=pltpu.CompilerParams(
            dimension_semantics=("parallel",),
            vmem_limit_bytes=vmem_limit,
        ),
        cost_estimate=_cost(M, Kp, Hp, Fp, jnp.dtype(out_dtype).itemsize),
    )(x_rows, w1, b1, w2, b2, bn_rows)


def _htiled_call(x_rows, w1, b1, w2, b2, bn_rows, *, tm, th, out_dtype,
                 vmem_limit):
    M, Kp = x_rows.shape
    Hp, Fp = w1.shape[1], w2.shape[1]
    return pl.pallas_call(
        _mlp_kernel_htiled,
        out_shape=jax.ShapeDtypeStruct((M, Fp), out_dtype),
        grid=(pl.cdiv(M, tm), pl.cdiv(Hp, th)),
        in_specs=[
            pl.BlockSpec((tm, Kp), lambda i, j: (i, 0)),   # x rows
            pl.BlockSpec((Kp, th), lambda i, j: (0, j)),   # W1 column tile
            pl.BlockSpec((1, th), lambda i, j: (0, j)),    # b1 tile
            pl.BlockSpec((th, Fp), lambda i, j: (j, 0)),   # W2 row tile
            pl.BlockSpec((1, Fp), lambda i, j: (0, 0)),    # b2
            pl.BlockSpec((tm, 4), lambda i, j: (i, 0)),    # packed BN affine
        ],
        out_specs=pl.BlockSpec((tm, Fp), lambda i, j: (i, 0)),
        scratch_shapes=[pltpu.VMEM((tm, Fp), jnp.float32)],
        compiler_params=pltpu.CompilerParams(
            dimension_semantics=("parallel", "arbitrary"),
            vmem_limit_bytes=vmem_limit,
        ),
        cost_estimate=_cost(M, Kp, Hp, Fp, jnp.dtype(out_dtype).itemsize),
    )(x_rows, w1, b1, w2, b2, bn_rows)


def mlp_pallas(x_rows, w1, b1, w2, b2, bn_rows, *, block_m=None, block_h=None,
               out_dtype=jnp.bfloat16, force_htiled=False):
    """Fused fc1 -> BN1 -> GELU -> fc2 -> BN2 over row tiles (eval mode)."""
    M, Kp = x_rows.shape
    Hp, Fp = w1.shape[1], w2.shape[1]
    out_itemsize = jnp.dtype(out_dtype).itemsize

    budget = _physical_vmem_bytes()
    if block_m is None:
        block_m = 1024 if budget >= (96 << 20) else 512   # v5e/v6e vs v7x

    resident_weight_bytes = 2 * (Kp * Hp + Hp * Fp)        # bf16 W1 + W2
    use_htiled = force_htiled or (2 * resident_weight_bytes > int(0.45 * budget))

    if use_htiled:
        th = min(Hp, block_h if block_h is not None else 512)
        th = max(128, (th // 128) * 128)
        # W1/W2 tiles are double-buffered in the pipeline.
        wbytes = 2 * 2 * (Kp * th + th * Fp)
        interm_cols = max(th, Fp)
    else:
        th = Hp
        wbytes = 2 * resident_weight_bytes   # worst case: double-buffer fallback
        interm_cols = max(Hp, Fp)

    # Row-tile choice: multiple of 16 (bf16 sublane packing), >=2 grid steps
    # when possible (keeps v7x's second TensorCore busy), shrunk to fit VMEM.
    tm = max(16, min(block_m, _round_up(pl.cdiv(M, 2), 16)))

    def footprint(tm_):
        streams = 2 * (tm_ * Kp * 2          # x (bf16), double-buffered
                       + tm_ * 128 * 4       # packed BN (lane-padded), 2 bufs
                       + tm_ * Fp * out_itemsize)   # output, 2 bufs
        interm = 3 * tm_ * interm_cols * 4   # f32 h / acc / compiler temps
        return wbytes + streams + interm

    while tm > 16 and footprint(tm) > int(0.8 * budget):
        tm = max(16, _round_up(tm // 2, 16))

    vmem_limit = min(int(0.85 * budget), 110 * 1024 * 1024)

    # Pad the row dimension so every block is full (lane/sublane dense stores).
    Mp = _round_up(M, tm)
    if Mp != M:
        x_rows = jnp.pad(x_rows, ((0, Mp - M), (0, 0)))
        bn_rows = jnp.pad(bn_rows, ((0, Mp - M), (0, 0)))

    if use_htiled:
        y = _htiled_call(x_rows, w1, b1, w2, b2, bn_rows, tm=tm, th=th,
                         out_dtype=out_dtype, vmem_limit=vmem_limit)
    else:
        try:
            y = _resident_call(x_rows, w1, b1, w2, b2, bn_rows, tm=tm,
                               out_dtype=out_dtype, vmem_limit=vmem_limit,
                               single_buffer_weights=True)
        except Exception:
            # pl.Buffered(1) unsupported on this JAX/Mosaic -> default buffering.
            y = _resident_call(x_rows, w1, b1, w2, b2, bn_rows, tm=tm,
                               out_dtype=out_dtype, vmem_limit=vmem_limit,
                               single_buffer_weights=False)
    return y[:M]


# ---------------------------------------------------------------------------
# Module wrapper
# ---------------------------------------------------------------------------

class MLPPallas:
    """JAX/Pallas equivalent of the PyTorch `MLP` module (eval mode)."""

    def __init__(self, n_patches, input_features, hidden_features,
                 output_features, bias, p, key,
                 compute_dtype=jnp.bfloat16, out_dtype=jnp.bfloat16,
                 block_m=None, block_h=None, force_htiled=False):
        self.n_patches = n_patches
        self.input_features = input_features
        self.hidden_features = hidden_features
        self.output_features = output_features
        self.use_bias = bias
        self.p = p                      # dropout prob (identity in eval mode)
        self.eps = 1e-5                 # BatchNorm1d default eps
        self.compute_dtype = compute_dtype
        self.out_dtype = out_dtype
        self.block_m = block_m
        self.block_h = block_h
        self.force_htiled = force_htiled

        k1, k2, k3, k4 = jax.random.split(key, 4)
        bound1 = 1.0 / (input_features ** 0.5)
        bound2 = 1.0 / (hidden_features ** 0.5)
        # nn.Linear default init (uniform +/- 1/sqrt(fan_in)); weights stored
        # already transposed to [in, out] so the kernel computes y = x @ W.
        self.w1 = jax.random.uniform(k1, (input_features, hidden_features),
                                     jnp.float32, -bound1, bound1)
        self.w2 = jax.random.uniform(k3, (hidden_features, output_features),
                                     jnp.float32, -bound2, bound2)
        if bias:
            self.b1 = jax.random.uniform(k2, (hidden_features,), jnp.float32,
                                         -bound1, bound1)
            self.b2 = jax.random.uniform(k4, (output_features,), jnp.float32,
                                         -bound2, bound2)
        else:
            self.b1 = jnp.zeros((hidden_features,), jnp.float32)
            self.b2 = jnp.zeros((output_features,), jnp.float32)

        # BatchNorm1d(n_patches) parameters / running stats (PyTorch defaults).
        self.gamma1 = jnp.ones((n_patches,), jnp.float32)
        self.beta1 = jnp.zeros((n_patches,), jnp.float32)
        self.mean1 = jnp.zeros((n_patches,), jnp.float32)
        self.var1 = jnp.ones((n_patches,), jnp.float32)
        self.gamma2 = jnp.ones((n_patches,), jnp.float32)
        self.beta2 = jnp.zeros((n_patches,), jnp.float32)
        self.mean2 = jnp.zeros((n_patches,), jnp.float32)
        self.var2 = jnp.ones((n_patches,), jnp.float32)

        # Lane-dense (multiple-of-128) padded, bf16-cast kernel operands,
        # hoisted out of __call__.
        self._Kp = _round_up(input_features, 128)
        self._Hp = _round_up(hidden_features, 128)
        self._Fp = _round_up(output_features, 128)
        self._pack_weights()
        self.refresh_batchnorm()

    def _pack_weights(self):
        Kp, Hp, Fp = self._Kp, self._Hp, self._Fp
        w1p = jnp.zeros((Kp, Hp), jnp.float32)
        w1p = w1p.at[:self.input_features, :self.hidden_features].set(self.w1)
        w2p = jnp.zeros((Hp, Fp), jnp.float32)
        w2p = w2p.at[:self.hidden_features, :self.output_features].set(self.w2)
        self.w1_p = w1p.astype(self.compute_dtype)
        self.w2_p = w2p.astype(self.compute_dtype)
        self.b1_p = jnp.zeros((1, Hp), jnp.float32).at[0, :self.hidden_features].set(self.b1)
        self.b2_p = jnp.zeros((1, Fp), jnp.float32).at[0, :self.output_features].set(self.b2)

    def refresh_batchnorm(self):
        """Fold eval-mode BatchNorm into one packed (n_patches, 4) affine.

        Columns: [scale1, shift1, scale2, shift2]. Call after changing stats.
        """
        s1 = self.gamma1 * lax.rsqrt(self.var1 + self.eps)
        t1 = self.beta1 - self.mean1 * s1
        s2 = self.gamma2 * lax.rsqrt(self.var2 + self.eps)
        t2 = self.beta2 - self.mean2 * s2
        self._bn_patch = jnp.stack([s1, t1, s2, t2], axis=1)   # (n_patches, 4)

    def __call__(self, x):
        # x: [B, n_patches, input_features]
        B, N, F_in = x.shape
        assert N == self.n_patches and F_in == self.input_features
        M = B * N
        Kp = self._Kp

        # Per-row (row = b*N + n) packed BN affine, one tiny (M, 4) stream.
        bn_rows = jnp.tile(self._bn_patch, (B, 1))

        x_rows = x.reshape(M, F_in)
        if Kp != F_in:
            x_rows = jnp.pad(x_rows, ((0, 0), (0, Kp - F_in)))
        x_rows = x_rows.astype(self.compute_dtype)

        y = mlp_pallas(x_rows, self.w1_p, self.b1_p, self.w2_p, self.b2_p,
                       bn_rows, block_m=self.block_m, block_h=self.block_h,
                       out_dtype=self.out_dtype, force_htiled=self.force_htiled)
        return y[:, :self.output_features].reshape(B, N, self.output_features)


def _reference_forward(m, x):
    """Pure-JAX f32 reference reproducing MLP.forward in eval() mode."""
    eps = m.eps
    h = jnp.einsum("bnk,kh->bnh", x, m.w1) + m.b1
    h = ((h - m.mean1[None, :, None]) * lax.rsqrt(m.var1 + eps)[None, :, None]
         * m.gamma1[None, :, None] + m.beta1[None, :, None])
    h = jax.nn.gelu(h, approximate=True)   # tanh form; matches the kernel
    y = jnp.einsum("bnh,hf->bnf", h, m.w2) + m.b2
    y = ((y - m.mean2[None, :, None]) * lax.rsqrt(m.var2 + eps)[None, :, None]
         * m.gamma2[None, :, None] + m.beta2[None, :, None])
    return y


if __name__ == "__main__":
    key = jax.random.PRNGKey(0)
    kp1, kp2, kx1, kx2, kb1, kb2 = jax.random.split(key, 6)

    def _randomize_bn(m, k):
        # Non-trivial "trained" stats so the fused affine path is exercised.
        ks = jax.random.split(k, 8)
        m.gamma1 = jax.random.uniform(ks[0], (m.n_patches,), jnp.float32, 0.5, 1.5)
        m.beta1 = 0.1 * jax.random.normal(ks[1], (m.n_patches,), jnp.float32)
        m.mean1 = 0.1 * jax.random.normal(ks[2], (m.n_patches,), jnp.float32)
        m.var1 = jax.random.uniform(ks[3], (m.n_patches,), jnp.float32, 0.5, 1.5)
        m.gamma2 = jax.random.uniform(ks[4], (m.n_patches,), jnp.float32, 0.5, 1.5)
        m.beta2 = 0.1 * jax.random.normal(ks[5], (m.n_patches,), jnp.float32)
        m.mean2 = 0.1 * jax.random.normal(ks[6], (m.n_patches,), jnp.float32)
        m.var2 = jax.random.uniform(ks[7], (m.n_patches,), jnp.float32, 0.5, 1.5)
        m.refresh_batchnorm()

    # (1) Small MLP -> weight-resident fused kernel.
    n_patches, input_features, hidden_features, output_features, B = 8, 32, 64, 32, 2
    mlp = MLPPallas(n_patches, input_features, hidden_features, output_features,
                    bias=True, p=0.1, key=kp1)
    _randomize_bn(mlp, kb1)
    x = jax.random.normal(kx1, (B, n_patches, input_features), jnp.float32)

    out = jax.block_until_ready(mlp(x))
    ref = jax.block_until_ready(_reference_forward(mlp, x))
    assert out.shape == (B, n_patches, output_features), out.shape
    o32 = np.asarray(out.astype(jnp.float32))
    r32 = np.asarray(ref)
    err1 = float(np.max(np.abs(o32 - r32)))
    assert np.allclose(o32, r32, atol=3e-2, rtol=3e-2), err1

    # (2) Larger hidden dim, forced hidden-tiled path (fc1 N-tiled, fc2
    #     K-reduction into an f32 VMEM accumulator across 2 grid steps).
    mlp2 = MLPPallas(8, 32, 192, 48, bias=True, p=0.1, key=kp2,
                     force_htiled=True, block_h=128)
    _randomize_bn(mlp2, kb2)
    x2 = jax.random.normal(kx2, (2, 8, 32), jnp.float32)

    out2 = jax.block_until_ready(mlp2(x2))
    ref2 = jax.block_until_ready(_reference_forward(mlp2, x2))
    assert out2.shape == (2, 8, 48), out2.shape
    o232 = np.asarray(out2.astype(jnp.float32))
    r232 = np.asarray(ref2)
    err2 = float(np.max(np.abs(o232 - r232)))
    assert np.allclose(o232, r232, atol=3e-2, rtol=3e-2), err2

    print("KERNEL_OK")
</pallas_src>

<mosaic_0001>
module attributes {stable_mosaic.version = 11 : i64} {
  func.func @_mlp_kernel_resident(%arg0: i32, %arg1: memref<16x128xbf16, #tpu.memory_space<vmem>>, %arg2: memref<128x128xbf16, #tpu.memory_space<vmem>>, %arg3: memref<1x128xf32, #tpu.memory_space<vmem>>, %arg4: memref<128x128xbf16, #tpu.memory_space<vmem>>, %arg5: memref<1x128xf32, #tpu.memory_space<vmem>>, %arg6: memref<16x4xf32, #tpu.memory_space<vmem>>, %arg7: memref<16x128xbf16, #tpu.memory_space<vmem>>) attributes {dimension_semantics = [#tpu.dimension_semantics<parallel>], iteration_bounds = array<i64: 1>, scalar_prefetch = 0 : i64, scratch_operands = 0 : i64, tpu.core_type = #tpu.core_type<tc>, window_params = [{transform_indices = @transform_0, window_bounds = array<i64: 16, 128>}, {pipeline_mode = #tpu.pipeline_mode<synchronous>, transform_indices = @transform_1, window_bounds = array<i64: 128, 128>}, {pipeline_mode = #tpu.pipeline_mode<synchronous>, transform_indices = @transform_2, window_bounds = array<i64: 1, 128>}, {pipeline_mode = #tpu.pipeline_mode<synchronous>, transform_indices = @transform_3, window_bounds = array<i64: 128, 128>}, {pipeline_mode = #tpu.pipeline_mode<synchronous>, transform_indices = @transform_4, window_bounds = array<i64: 1, 128>}, {transform_indices = @transform_5, window_bounds = array<i64: 16, 4>}, {transform_indices = @transform_6, window_bounds = array<i64: 16, 128>}]} {
    %c0 = arith.constant 0 : index
    %c0_0 = arith.constant 0 : index
    %0 = vector.load %arg6[%c0, %c0_0] : memref<16x4xf32, #tpu.memory_space<vmem>>, vector<16x4xf32>
    %1 = vector.extract_strided_slice %0 {offsets = [0, 0], sizes = [16, 1], strides = [1, 1]} : vector<16x4xf32> to vector<16x1xf32>
    %2 = vector.extract_strided_slice %0 {offsets = [0, 1], sizes = [16, 1], strides = [1, 1]} : vector<16x4xf32> to vector<16x1xf32>
    %3 = vector.extract_strided_slice %0 {offsets = [0, 2], sizes = [16, 1], strides = [1, 1]} : vector<16x4xf32> to vector<16x1xf32>
    %4 = vector.extract_strided_slice %0 {offsets = [0, 3], sizes = [16, 1], strides = [1, 1]} : vector<16x4xf32> to vector<16x1xf32>
    %c0_1 = arith.constant 0 : index
    %c0_2 = arith.constant 0 : index
    %5 = vector.load %arg1[%c0_1, %c0_2] : memref<16x128xbf16, #tpu.memory_space<vmem>>, vector<16x128xbf16>
    %c0_3 = arith.constant 0 : index
    %c0_4 = arith.constant 0 : index
    %6 = vector.load %arg2[%c0_3, %c0_4] : memref<128x128xbf16, #tpu.memory_space<vmem>>, vector<128x128xbf16>
    %cst = arith.constant dense<0.000000e+00> : vector<16x128xf32>
    %7 = tpu.matmul %5, %6, %cst {dimension_numbers = #tpu.dot_dimension_numbers<[1], [0], [0], [1], [0, 0, 1, 1], [], []>} : vector<16x128xbf16>, vector<128x128xbf16>, vector<16x128xf32> -> vector<16x128xf32>
    %c0_5 = arith.constant 0 : index
    %c0_6 = arith.constant 0 : index
    %8 = vector.load %arg3[%c0_5, %c0_6] : memref<1x128xf32, #tpu.memory_space<vmem>>, vector<1x128xf32>
    %9 = vector.broadcast %8 : vector<1x128xf32> to vector<16x128xf32>
    %10 = arith.addf %7, %9 : vector<16x128xf32>
    %11 = vector.broadcast %1 : vector<16x1xf32> to vector<16x128xf32>
    %12 = arith.mulf %10, %11 : vector<16x128xf32>
    %13 = vector.broadcast %2 : vector<16x1xf32> to vector<16x128xf32>
    %14 = arith.addf %12, %13 : vector<16x128xf32>
    %cst_7 = arith.constant 0.797884583 : f32
    %15 = vector.broadcast %cst_7 : f32 to vector<16x128xf32>
    %16 = arith.mulf %15, %14 : vector<16x128xf32>
    %17 = arith.mulf %14, %14 : vector<16x128xf32>
    %cst_8 = arith.constant 4.471500e-02 : f32
    %18 = vector.broadcast %cst_8 : f32 to vector<16x128xf32>
    %19 = arith.mulf %18, %17 : vector<16x128xf32>
    %cst_9 = arith.constant 1.000000e+00 : f32
    %20 = vector.broadcast %cst_9 : f32 to vector<16x128xf32>
    %21 = arith.addf %20, %19 : vector<16x128xf32>
    %22 = arith.mulf %16, %21 : vector<16x128xf32>
    %cst_10 = arith.constant 5.000000e-01 : f32
    %23 = vector.broadcast %cst_10 : f32 to vector<16x128xf32>
    %24 = arith.mulf %23, %14 : vector<16x128xf32>
    %25 = math.tanh %22 : vector<16x128xf32>
    %cst_11 = arith.constant 1.000000e+00 : f32
    %26 = vector.broadcast %cst_11 : f32 to vector<16x128xf32>
    %27 = arith.addf %26, %25 : vector<16x128xf32>
    %28 = arith.mulf %24, %27 : vector<16x128xf32>
    %29 = arith.truncf %28 : vector<16x128xf32> to vector<16x128xbf16>
    %c0_12 = arith.constant 0 : index
    %c0_13 = arith.constant 0 : index
    %30 = vector.load %arg4[%c0_12, %c0_13] : memref<128x128xbf16, #tpu.memory_space<vmem>>, vector<128x128xbf16>
    %cst_14 = arith.constant dense<0.000000e+00> : vector<16x128xf32>
    %31 = tpu.matmul %29, %30, %cst_14 {dimension_numbers = #tpu.dot_dimension_numbers<[1], [0], [0], [1], [0, 0, 1, 1], [], []>} : vector<16x128xbf16>, vector<128x128xbf16>, vector<16x128xf32> -> vector<16x128xf32>
    %c0_15 = arith.constant 0 : index
    %c0_16 = arith.constant 0 : index
    %32 = vector.load %arg5[%c0_15, %c0_16] : memref<1x128xf32, #tpu.memory_space<vmem>>, vector<1x128xf32>
    %33 = vector.broadcast %32 : vector<1x128xf32> to vector<16x128xf32>
    %34 = arith.addf %31, %33 : vector<16x128xf32>
    %35 = vector.broadcast %3 : vector<16x1xf32> to vector<16x128xf32>
    %36 = arith.mulf %34, %35 : vector<16x128xf32>
    %37 = vector.broadcast %4 : vector<16x1xf32> to vector<16x128xf32>
    %38 = arith.addf %36, %37 : vector<16x128xf32>
    %39 = arith.truncf %38 : vector<16x128xf32> to vector<16x128xbf16>
    %c0_17 = arith.constant 0 : index
    %c0_18 = arith.constant 0 : index
    %40 = vector.load %arg7[%c0_17, %c0_18] : memref<16x128xbf16, #tpu.memory_space<vmem>>, vector<16x128xbf16>
    tpu.vector_store %arg7[%c0_17, %c0_18], %39 {strides = array<i32>} : memref<16x128xbf16, #tpu.memory_space<vmem>>, vector<16x128xbf16>,
    return
  }
  func.func @transform_0(%arg0: i32) -> (i32, i32) {
    %c0_i32 = arith.constant 0 : i32
    %c0_i32_0 = arith.constant 0 : i32
    return %arg0, %c0_i32 : i32, i32
  }
  func.func @transform_1(%arg0: i32) -> (i32, i32) {
    %c0_i32 = arith.constant 0 : i32
    %c0_i32_0 = arith.constant 0 : i32
    %c0_i32_1 = arith.constant 0 : i32
    return %c0_i32, %c0_i32_0 : i32, i32
  }
  func.func @transform_2(%arg0: i32) -> (i32, i32) {
    %c0_i32 = arith.constant 0 : i32
    %c0_i32_0 = arith.constant 0 : i32
    %c0_i32_1 = arith.constant 0 : i32
    return %c0_i32, %c0_i32_0 : i32, i32
  }
  func.func @transform_3(%arg0: i32) -> (i32, i32) {
    %c0_i32 = arith.constant 0 : i32
    %c0_i32_0 = arith.constant 0 : i32
    %c0_i32_1 = arith.constant 0 : i32
    return %c0_i32, %c0_i32_0 : i32, i32
  }
  func.func @transform_4(%arg0: i32) -> (i32, i32) {
    %c0_i32 = arith.constant 0 : i32
    %c0_i32_0 = arith.constant 0 : i32
    %c0_i32_1 = arith.constant 0 : i32
    return %c0_i32, %c0_i32_0 : i32, i32
  }
  func.func @transform_5(%arg0: i32) -> (i32, i32) {
    %c0_i32 = arith.constant 0 : i32
    %c0_i32_0 = arith.constant 0 : i32
    return %arg0, %c0_i32 : i32, i32
  }
  func.func @transform_6(%arg0: i32) -> (i32, i32) {
    %c0_i32 = arith.constant 0 : i32
    %c0_i32_0 = arith.constant 0 : i32
    return %arg0, %c0_i32 : i32, i32
  }
}

module attributes {stable_mosaic.version = 11 : i64} {
  func.func @_mlp_kernel_resident(%arg0: i32, %arg1: memref<16x128xbf16, #tpu.memory_space<vmem>>, %arg2: memref<128x128xbf16, #tpu.memory_space<vmem>>, %arg3: memref<1x128xf32, #tpu.memory_space<vmem>>, %arg4: memref<128x128xbf16, #tpu.memory_space<vmem>>, %arg5: memref<1x128xf32, #tpu.memory_space<vmem>>, %arg6: memref<16x4xf32, #tpu.memory_space<vmem>>, %arg7: memref<16x128xbf16, #tpu.memory_space<vmem>>) attributes {dimension_semantics = [#tpu.dimension_semantics<parallel>], iteration_bounds = array<i64: 1>, scalar_prefetch = 0 : i64, scratch_operands = 0 : i64, tpu.core_type = #tpu.core_type<tc>, window_params = [{transform_indices = @transform_0, window_bounds = array<i64: 16, 128>}, {pipeline_mode = #tpu.pipeline_mode<synchronous>, transform_indices = @transform_1, window_bounds = array<i64: 128, 128>}, {pipeline_mode = #tpu.pipeline_mode<synchronous>, transform_indices = @transform_2, window_bounds = array<i64: 1, 128>}, {pipeline_mode = #tpu.pipeline_mode<synchronous>, transform_indices = @transform_3, window_bounds = array<i64: 128, 128>}, {pipeline_mode = #tpu.pipeline_mode<synchronous>, transform_indices = @transform_4, window_bounds = array<i64: 1, 128>}, {transform_indices = @transform_5, window_bounds = array<i64: 16, 4>}, {transform_indices = @transform_6, window_bounds = array<i64: 16, 128>}]} {
    %c0 = arith.constant 0 : index
    %c0_0 = arith.constant 0 : index
    %0 = vector.load %arg6[%c0, %c0_0] : memref<16x4xf32, #tpu.memory_space<vmem>>, vector<16x4xf32>
    %1 = vector.extract_strided_slice %0 {offsets = [0, 0], sizes = [16, 1], strides = [1, 1]} : vector<16x4xf32> to vector<16x1xf32>
    %2 = vector.extract_strided_slice %0 {offsets = [0, 1], sizes = [16, 1], strides = [1, 1]} : vector<16x4xf32> to vector<16x1xf32>
    %3 = vector.extract_strided_slice %0 {offsets = [0, 2], sizes = [16, 1], strides = [1, 1]} : vector<16x4xf32> to vector<16x1xf32>
    %4 = vector.extract_strided_slice %0 {offsets = [0, 3], sizes = [16, 1], strides = [1, 1]} : vector<16x4xf32> to vector<16x1xf32>
    %c0_1 = arith.constant 0 : index
    %c0_2 = arith.constant 0 : index
    %5 = vector.load %arg1[%c0_1, %c0_2] : memref<16x128xbf16, #tpu.memory_space<vmem>>, vector<16x128xbf16>
    %c0_3 = arith.constant 0 : index
    %c0_4 = arith.constant 0 : index
    %6 = vector.load %arg2[%c0_3, %c0_4] : memref<128x128xbf16, #tpu.memory_space<vmem>>, vector<128x128xbf16>
    %cst = arith.constant dense<0.000000e+00> : vector<16x128xf32>
    %7 = tpu.matmul %5, %6, %cst {dimension_numbers = #tpu.dot_dimension_numbers<[1], [0], [0], [1], [0, 0, 1, 1], [], []>} : vector<16x128xbf16>, vector<128x128xbf16>, vector<16x128xf32> -> vector<16x128xf32>
    %c0_5 = arith.constant 0 : index
    %c0_6 = arith.constant 0 : index
    %8 = vector.load %arg3[%c0_5, %c0_6] : memref<1x128xf32, #tpu.memory_space<vmem>>, vector<1x128xf32>
    %9 = vector.broadcast %8 : vector<1x128xf32> to vector<16x128xf32>
    %10 = arith.addf %7, %9 : vector<16x128xf32>
    %11 = vector.broadcast %1 : vector<16x1xf32> to vector<16x128xf32>
    %12 = arith.mulf %10, %11 : vector<16x128xf32>
    %13 = vector.broadcast %2 : vector<16x1xf32> to vector<16x128xf32>
    %14 = arith.addf %12, %13 : vector<16x128xf32>
    %cst_7 = arith.constant 0.797884583 : f32
    %15 = vector.broadcast %cst_7 : f32 to vector<16x128xf32>
    %16 = arith.mulf %15, %14 : vector<16x128xf32>
    %17 = arith.mulf %14, %14 : vector<16x128xf32>
    %cst_8 = arith.constant 4.471500e-02 : f32
    %18 = vector.broadcast %cst_8 : f32 to vector<16x128xf32>
    %19 = arith.mulf %18, %17 : vector<16x128xf32>
    %cst_9 = arith.constant 1.000000e+00 : f32
    %20 = vector.broadcast %cst_9 : f32 to vector<16x128xf32>
    %21 = arith.addf %20, %19 : vector<16x128xf32>
    %22 = arith.mulf %16, %21 : vector<16x128xf32>
    %cst_10 = arith.constant 5.000000e-01 : f32
    %23 = vector.broadcast %cst_10 : f32 to vector<16x128xf32>
    %24 = arith.mulf %23, %14 : vector<16x128xf32>
    %25 = math.tanh %22 : vector<16x128xf32>
    %cst_11 = arith.constant 1.000000e+00 : f32
    %26 = vector.broadcast %cst_11 : f32 to vector<16x128xf32>
    %27 = arith.addf %26, %25 : vector<16x128xf32>
    %28 = arith.mulf %24, %27 : vector<16x128xf32>
    %29 = arith.truncf %28 : vector<16x128xf32> to vector<16x128xbf16>
    %c0_12 = arith.constant 0 : index
    %c0_13 = arith.constant 0 : index
    %30 = vector.load %arg4[%c0_12, %c0_13] : memref<128x128xbf16, #tpu.memory_space<vmem>>, vector<128x128xbf16>
    %cst_14 = arith.constant dense<0.000000e+00> : vector<16x128xf32>
    %31 = tpu.matmul %29, %30, %cst_14 {dimension_numbers = #tpu.dot_dimension_numbers<[1], [0], [0], [1], [0, 0, 1, 1], [], []>} : vector<16x128xbf16>, vector<128x128xbf16>, vector<16x128xf32> -> vector<16x128xf32>
    %c0_15 = arith.constant 0 : index
    %c0_16 = arith.constant 0 : index
    %32 = vector.load %arg5[%c0_15, %c0_16] : memref<1x128xf32, #tpu.memory_space<vmem>>, vector<1x128xf32>
    %33 = vector.broadcast %32 : vector<1x128xf32> to vector<16x128xf32>
    %34 = arith.addf %31, %33 : vector<16x128xf32>
    %35 = vector.broadcast %3 : vector<16x1xf32> to vector<16x128xf32>
    %36 = arith.mulf %34, %35 : vector<16x128xf32>
    %37 = vector.broadcast %4 : vector<16x1xf32> to vector<16x128xf32>
    %38 = arith.addf %36, %37 : vector<16x128xf32>
    %39 = arith.truncf %38 : vector<16x128xf32> to vector<16x128xbf16>
    %c0_17 = arith.constant 0 : index
    %c0_18 = arith.constant 0 : index
    %40 = vector.load %arg7[%c0_17, %c0_18] : memref<16x128xbf16, #tpu.memory_space<vmem>>, vector<16x128xbf16>
    tpu.vector_store %arg7[%c0_17, %c0_18], %39 {strides = array<i32>} : memref<16x128xbf16, #tpu.memory_space<vmem>>, vector<16x128xbf16>,
    return
  }
  func.func @transform_0(%arg0: i32) -> (i32, i32) {
    %c0_i32 = arith.constant 0 : i32
    %c0_i32_0 = arith.constant 0 : i32
    return %arg0, %c0_i32 : i32, i32
  }
  func.func @transform_1(%arg0: i32) -> (i32, i32) {
    %c0_i32 = arith.constant 0 : i32
    %c0_i32_0 = arith.constant 0 : i32
    %c0_i32_1 = arith.constant 0 : i32
    return %c0_i32, %c0_i32_0 : i32, i32
  }
  func.func @transform_2(%arg0: i32) -> (i32, i32) {
    %c0_i32 = arith.constant 0 : i32
    %c0_i32_0 = arith.constant 0 : i32
    %c0_i32_1 = arith.constant 0 : i32
    return %c0_i32, %c0_i32_0 : i32, i32
  }
  func.func @transform_3(%arg0: i32) -> (i32, i32) {
    %c0_i32 = arith.constant 0 : i32
    %c0_i32_0 = arith.constant 0 : i32
    %c0_i32_1 = arith.constant 0 : i32
    return %c0_i32, %c0_i32_0 : i32, i32
  }
  func.func @transform_4(%arg0: i32) -> (i32, i32) {
    %c0_i32 = arith.constant 0 : i32
    %c0_i32_0 = arith.constant 0 : i32
    %c0_i32_1 = arith.constant 0 : i32
    return %c0_i32, %c0_i32_0 : i32, i32
  }
  func.func @transform_5(%arg0: i32) -> (i32, i32) {
    %c0_i32 = arith.constant 0 : i32
    %c0_i32_0 = arith.constant 0 : i32
    return %arg0, %c0_i32 : i32, i32
  }
  func.func @transform_6(%arg0: i32) -> (i32, i32) {
    %c0_i32 = arith.constant 0 : i32
    %c0_i32_0 = arith.constant 0 : i32
    return %arg0, %c0_i32 : i32, i32
  }
}

</mosaic_0001>

<llo_original>
// kernel: tpu_custom_call.1
$region0: #{tpu_custom_call.1}
  #allocation0 [shape = 'u32[]', space=smem, size = 0x4, offset = 0x4, fixed_abs, tag = 'smem constant byte address 0x4 - core index']
  #allocation1 [shape = 'u32[144,128]{1,0:T(1,128)}', space=vmem, size = 0x12000, scoped, tag = 'internal scratch']
  %s0 = inlined_call_operand.hbm [shape: bf16[16,128], index: 0, kind: input, shape index: {}]
  %s1 = inlined_call_operand.hbm [shape: bf16[128,128], index: 1, kind: input, shape index: {}]
  %s2 = inlined_call_operand.hbm [shape: f32[1,128], index: 2, kind: input, shape index: {}]
  %s3 = inlined_call_operand.hbm [shape: bf16[128,128], index: 3, kind: input, shape index: {}]
  %s4 = inlined_call_operand.hbm [shape: f32[1,128], index: 4, kind: input, shape index: {}]
  %s5 = inlined_call_operand.hbm [shape: f32[16,4], index: 5, kind: input, shape index: {}]
  %s6 = inlined_call_operand.hbm [shape: bf16[16,128], index: 6, kind: output, shape index: {}]
  %s7 = sld [smem:[#allocation0]]
  $region58: #{tpu_custom_call.1} parent=0
    _
  %s9 = ssub.s32 1, %s7
  %s10 = scalar_select 0, %s9, %s7
  $region1: #{tpu_custom_call.1} parent=0
    #allocation2 [shape = 'u8[4096]{0}', space=vmem, size = 0x1000, scoped, tag = 'input window, operand 0, single buffered']
    #allocation3 [shape = 's32[1]{0}', space=sflag, size = 0x4, scoped, tag = 'scoped memory for tpu_custom_call.1']
    #allocation4 [shape = 's32[1]{0}', space=sflag, size = 0x4, scoped, tag = 'scoped memory for tpu_custom_call.1']
    #allocation5 [shape = 'u8[32768]{0}', space=vmem, size = 0x8000, scoped, tag = 'input window, operand 1, single buffered']
    #allocation6 [shape = 's32[1]{0}', space=sflag, size = 0x4, scoped, tag = 'scoped memory for tpu_custom_call.1']
    #allocation7 [shape = 'u8[512]{0}', space=vmem, size = 0x400, scoped, tag = 'input window, operand 2, single buffered']
    #allocation8 [shape = 'u8[32768]{0}', space=vmem, size = 0x8000, scoped, tag = 'input window, operand 3, single buffered']
    #allocation9 [shape = 's32[1]{0}', space=sflag, size = 0x4, scoped, tag = 'scoped memory for tpu_custom_call.1']
    #allocation10 [shape = 'u8[512]{0}', space=vmem, size = 0x400, scoped, tag = 'input window, operand 4, single buffered']
    #allocation11 [shape = 'u8[8192]{0}', space=vmem, size = 0x2000, scoped, tag = 'input window, operand 5, single buffered']
    #allocation12 [shape = 's32[1]{0}', space=sflag, size = 0x4, scoped, tag = 'scoped memory for tpu_custom_call.1']
    #allocation13 [shape = 'u8[4096]{0}', space=vmem, size = 0x1000, scoped, tag = 'output window, operand 0, single buffered']
    %11 = vsyncpa [#allocation3], 0
    %12 = vsyncpa [#allocation6], 0
    %13 = vsyncpa [#allocation9], 0
    %14 = vsyncpa [#allocation12], 0
    %15 = vsyncpa [#allocation4], 0
    // Predicated region
    $region2: #{tpu_custom_call.1} parent=1 // pred_check
      _
    $region3: #{tpu_custom_call.1} parent=1 // pred_check_branch
      %17 = sbr.rel (0) target = $region5
    $region4: #{tpu_custom_call.1} parent=1 // pred_region
      %s19 = ssub.s32 128, 128
      %20 = vsyncadd [#allocation3], %s19
      %s21 = sshll.u32 [#allocation2], 4
      %s22 = int_to_ptr.vmem [resolvable:$true] %s21
      %27 = dma.hbm_to_vmem [thread:$0]  %s0, 128, %s22, [#allocation3], 64, 64, 4
    $region5: #{tpu_custom_call.1} parent=1 // pred_fallthru
      _
    // Predicated region
    $region6: #{tpu_custom_call.1} parent=1 // pred_check
      _
    $region7: #{tpu_custom_call.1} parent=1 // pred_check_branch
      %29 = sbr.rel (0) target = $region9
    $region8: #{tpu_custom_call.1} parent=1 // pred_region
      %s31 = ssub.s32 1024, 1024
      %32 = vsyncadd [#allocation6], %s31
      %s33 = sshll.u32 [#allocation5], 4
      %s34 = int_to_ptr.vmem [resolvable:$true] %s33
      %39 = dma.hbm_to_vmem [thread:$0]  %s1, 1024, %s34, [#allocation6], 64, 64, 4
    $region9: #{tpu_custom_call.1} parent=1 // pred_fallthru
      _
    // Predicated region
    $region10: #{tpu_custom_call.1} parent=1 // pred_check
      _
    $region11: #{tpu_custom_call.1} parent=1 // pred_check_branch
      %41 = sbr.rel (0) target = $region13
    $region12: #{tpu_custom_call.1} parent=1 // pred_region
      %s43 = ssub.s32 16, 16
      %44 = vsyncadd [#allocation6], %s43
      %s46 = sshll.u32 [#allocation7], 4
      %s47 = int_to_ptr.vmem [resolvable:$true] %s46
      %49 = dma.hbm_to_vmem [thread:$0]  %s2, 16, %s47, [#allocation6]
    $region13: #{tpu_custom_call.1} parent=1 // pred_fallthru
      _
    // Predicated region
    $region14: #{tpu_custom_call.1} parent=1 // pred_check
      _
    $region15: #{tpu_custom_call.1} parent=1 // pred_check_branch
      %51 = sbr.rel (0) target = $region17
    $region16: #{tpu_custom_call.1} parent=1 // pred_region
      %s53 = ssub.s32 1024, 1024
      %54 = vsyncadd [#allocation9], %s53
      %s55 = sshll.u32 [#allocation8], 4
      %s56 = int_to_ptr.vmem [resolvable:$true] %s55
      %61 = dma.hbm_to_vmem [thread:$0]  %s3, 1024, %s56, [#allocation9], 64, 64, 4
    $region17: #{tpu_custom_call.1} parent=1 // pred_fallthru
      _
    // Predicated region
    $region18: #{tpu_custom_call.1} parent=1 // pred_check
      _
    $region19: #{tpu_custom_call.1} parent=1 // pred_check_branch
      %63 = sbr.rel (0) target = $region21
    $region20: #{tpu_custom_call.1} parent=1 // pred_region
      %s65 = ssub.s32 16, 16
      %66 = vsyncadd [#allocation9], %s65
      %s68 = sshll.u32 [#allocation10], 4
      %s69 = int_to_ptr.vmem [resolvable:$true] %s68
      %71 = dma.hbm_to_vmem [thread:$0]  %s4, 16, %s69, [#allocation9]
    $region21: #{tpu_custom_call.1} parent=1 // pred_fallthru
      _
    // Predicated region
    $region22: #{tpu_custom_call.1} parent=1 // pred_check
      _
    $region23: #{tpu_custom_call.1} parent=1 // pred_check_branch
      %73 = sbr.rel (0) target = $region25
    $region24: #{tpu_custom_call.1} parent=1 // pred_region
      %s75 = ssub.s32 256, 256
      %76 = vsyncadd [#allocation12], %s75
      %s77 = sshll.u32 [#allocation11], 4
      %s78 = int_to_ptr.vmem [resolvable:$true] %s77
      %83 = dma.hbm_to_vmem [thread:$0]  %s5, 256, %s78, [#allocation12], 128, 128, 8
    $region25: #{tpu_custom_call.1} parent=1 // pred_fallthru
      _
    // Predicated region
    $region26: #{tpu_custom_call.1} parent=1 // pred_check
      _
    $region27: #{tpu_custom_call.1} parent=1 // pred_check_branch
      %85 = sbr.rel (0) target = $region29
    $region28: #{tpu_custom_call.1} parent=1 // pred_region
      %86 = dma.done [#allocation3], 128
    $region29: #{tpu_custom_call.1} parent=1 // pred_fallthru
      _
    // Predicated region
    $region30: #{tpu_custom_call.1} parent=1 // pred_check
      _
    $region31: #{tpu_custom_call.1} parent=1 // pred_check_branch
      %88 = sbr.rel (0) target = $region33
    $region32: #{tpu_custom_call.1} parent=1 // pred_region
      %89 = dma.done [#allocation6], 1024
    $region33: #{tpu_custom_call.1} parent=1 // pred_fallthru
      _
    // Predicated region
    $region34: #{tpu_custom_call.1} parent=1 // pred_check
      _
    $region35: #{tpu_custom_call.1} parent=1 // pred_check_branch
      %91 = sbr.rel (0) target = $region37
    $region36: #{tpu_custom_call.1} parent=1 // pred_region
      %92 = dma.done [#allocation6], 16
    $region37: #{tpu_custom_call.1} parent=1 // pred_fallthru
      _
    // Predicated region
    $region38: #{tpu_custom_call.1} parent=1 // pred_check
      _
    $region39: #{tpu_custom_call.1} parent=1 // pred_check_branch
      %94 = sbr.rel (0) target = $region41
    $region40: #{tpu_custom_call.1} parent=1 // pred_region
      %95 = dma.done [#allocation9], 1024
    $region41: #{tpu_custom_call.1} parent=1 // pred_fallthru
      _
    // Predicated region
    $region42: #{tpu_custom_call.1} parent=1 // pred_check
      _
    $region43: #{tpu_custom_call.1} parent=1 // pred_check_branch
      %97 = sbr.rel (0) target = $region45
    $region44: #{tpu_custom_call.1} parent=1 // pred_region
      %98 = dma.done [#allocation9], 16
    $region45: #{tpu_custom_call.1} parent=1 // pred_fallthru
      _
    // Predicated region
    $region46: #{tpu_custom_call.1} parent=1 // pred_check
      _
    $region47: #{tpu_custom_call.1} parent=1 // pred_check_branch
      %100 = sbr.rel (0) target = $region49
    $region48: #{tpu_custom_call.1} parent=1 // pred_region
      %101 = dma.done [#allocation12], 256
    $region49: #{tpu_custom_call.1} parent=1 // pred_fallthru
      _
    %v103 = vld [vmem:[#allocation11] sm:$0xff]
    %v104 = vld [vmem:[#allocation11 + $0x8] sm:$0xff]
    %v105 = vld [vmem:[#allocation2] sm:$0xf]
    %v106 = vld [vmem:[#allocation2 + $0x4] sm:$0xf]
    %v107 = vld [vmem:[#allocation5] sm:$0xf]
    %v108 = vld [vmem:[#allocation5 + $0x4] sm:$0xf]
    %v109 = vld [vmem:[#allocation5 + $0x8] sm:$0xf]
    %v110 = vld [vmem:[#allocation5 + $0xc] sm:$0xf]
    %v111 = vld [vmem:[#allocation5 + $0x10] sm:$0xf]
    %v112 = vld [vmem:[#allocation5 + $0x14] sm:$0xf]
    %v113 = vld [vmem:[#allocation5 + $0x18] sm:$0xf]
    %v114 = vld [vmem:[#allocation5 + $0x1c] sm:$0xf]
    %v115 = vld [vmem:[#allocation5 + $0x20] sm:$0xf]
    %v116 = vld [vmem:[#allocation5 + $0x24] sm:$0xf]
    %v117 = vld [vmem:[#allocation5 + $0x28] sm:$0xf]
    %v118 = vld [vmem:[#allocation5 + $0x2c] sm:$0xf]
    %v119 = vld [vmem:[#allocation5 + $0x30] sm:$0xf]
    %v120 = vld [vmem:[#allocation5 + $0x34] sm:$0xf]
    %v121 = vld [vmem:[#allocation5 + $0x38] sm:$0xf]
    %v122 = vld [vmem:[#allocation5 + $0x3c] sm:$0xf]
    %v123 = vld [vmem:[#allocation7] sm:$0x1]
    %v125 = vlaneseq
    %v126 = vshrl.u32 %v125, 7
    %v127 = vsub.s32 0, %v126
    %v128 = vrot.slane %v123, %v127
    %v132 = vunpack.c.l.b16 %v105
    %v133 = vunpack.c.l.b16 %v106
    %v134 = vpack.c.b16 %v133, %v132
    %v152 = vunpack.c.l.b16 %v107
    %v153 = vunpack.c.l.b16 %v108
    %v154 = vunpack.c.l.b16 %v109
    %v155 = vunpack.c.l.b16 %v110
    %v156 = vunpack.c.l.b16 %v111
    %v157 = vunpack.c.l.b16 %v112
    %v158 = vunpack.c.l.b16 %v113
    %v159 = vunpack.c.l.b16 %v114
    %v160 = vunpack.c.l.b16 %v115
    %v161 = vunpack.c.l.b16 %v116
    %v162 = vunpack.c.l.b16 %v117
    %v163 = vunpack.c.l.b16 %v118
    %v164 = vunpack.c.l.b16 %v119
    %v165 = vunpack.c.l.b16 %v120
    %v166 = vunpack.c.l.b16 %v121
    %v167 = vunpack.c.l.b16 %v122
    %v168 = vpack.c.b16 %v153, %v152
    %v169 = vpack.c.b16 %v155, %v154
    %v170 = vpack.c.b16 %v157, %v156
    %v171 = vpack.c.b16 %v159, %v158
    %v172 = vpack.c.b16 %v161, %v160
    %v173 = vpack.c.b16 %v163, %v162
    %v174 = vpack.c.b16 %v165, %v164
    %v175 = vpack.c.b16 %v167, %v166
    %184 = vmatprep.subr.bf16.mxu0 0
    %185 = vmatpush1.bf16.msra.mxu0 %v168
    %186 = vmatprep.subr.bf16.mxu0 0
    %187 = vmatpush1.bf16.msra.mxu0 %v169
    %188 = vmatprep.subr.bf16.mxu0 0
    %189 = vmatpush1.bf16.msra.mxu0 %v170
    %190 = vmatprep.subr.bf16.mxu0 0
    %191 = vmatpush1.bf16.msra.mxu0 %v171
    %192 = vmatprep.subr.bf16.mxu0 0
    %193 = vmatpush1.bf16.msra.mxu0 %v172
    %194 = vmatprep.subr.bf16.mxu0 0
    %195 = vmatpush1.bf16.msra.mxu0 %v173
    %196 = vmatprep.subr.bf16.mxu0 0
    %197 = vmatpush1.bf16.msra.mxu0 %v174
    %198 = vmatprep.subr.bf16.mxu0 0
    %199 = vmatpush1.bf16.msra.mxu0 %v175
    %200 = vmatprep.subr.bf16.mxu0 0
    %201 = vmatpush1.bf16.msra.mxu0 0
    %202 = vmatprep.subr.bf16.mxu0 0
    %203 = vmatpush1.bf16.msra.mxu0 0
    %204 = vmatprep.subr.bf16.mxu0 0
    %205 = vmatpush1.bf16.msra.mxu0 0
    %206 = vmatprep.subr.bf16.mxu0 0
    %207 = vmatpush1.bf16.msra.mxu0 0
    %208 = vmatprep.subr.bf16.mxu0 0
    %209 = vmatpush1.bf16.msra.mxu0 0
    %210 = vmatprep.subr.bf16.mxu0 0
    %211 = vmatpush1.bf16.msra.mxu0 0
    %212 = vmatprep.subr.bf16.mxu0 0
    %213 = vmatpush1.bf16.msra.mxu0 0
    %214 = vmatprep.subr.bf16.mxu0 0
    %215 = vmatpush1.bf16.msra.mxu0 0
    %216 = vmatprep.mubr.bf16.mxu0 0
    %217 = vmatmul.mubr.bf16.gmra.mrb[0].mxu0 %v134
    %v218 = vpop.f32.mrb[0].mxu0
    %v219 = vadd.f32 %v128, %v218
    %v220 = vpop.f32.mrb[0].mxu0
    %v221 = vpop.f32.mrb[0].mxu0
    %v222 = vadd.f32 %v128, %v221
    %v223 = vpop.f32.mrb[0].mxu0
    %224 = vdwg.mxu0
    %226 = vset.pattern.permute.xlu0 0
    %227 = vperm.xlu0 %226, %v103
    %v228 = vpop.permute.xlu0 %227
    %231 = vset.pattern.permute.xlu0 0
    %232 = vperm.xlu0 %231, %v104
    %v233 = vpop.permute.xlu0 %232
    %v235 = vmul.f32 %v219, %v228
    %v236 = vmul.f32 %v222, %v233
    %237 = vset.pattern.permute.xlu0 1
    %238 = vperm.xlu0 %237, %v103
    %v239 = vpop.permute.xlu0 %238
    %241 = vset.pattern.permute.xlu0 1
    %242 = vperm.xlu0 %241, %v104
    %v243 = vpop.permute.xlu0 %242
    %v245 = vadd.f32 %v235, %v239
    %v246 = vadd.f32 %v236, %v243
    %v247 = vmul.f32 %v245, 0.7978846
    %v248 = vmul.f32 %v246, 0.7978846
    %v249 = vmul.f32 %v245, %v245
    %v250 = vmul.f32 %v246, %v246
    %v251 = vmul.f32 %v249, 0.044715
    %v252 = vmul.f32 %v250, 0.044715
    %v253 = vadd.f32 %v251, 1.0
    %v254 = vadd.f32 %v252, 1.0
    %v255 = vmul.f32 %v247, %v253
    %v256 = vmul.f32 %v248, %v254
    %v257 = vmul.f32 %v245, 0.5
    %v258 = vmul.f32 %v246, 0.5
    %v259 = vtanh.pop %v255
    %v260 = vtanh.pop %v256
    %v261 = vadd.f32 %v259, 1.0
    %v262 = vadd.f32 %v260, 1.0
    %v263 = vmul.f32 %v257, %v261
    %v264 = vmul.f32 %v258, %v262
    %v265 = vpack.c.bf16 %v264, %v263
    %v266 = vld [vmem:[#allocation8] sm:$0xf]
    %v267 = vld [vmem:[#allocation8 + $0x4] sm:$0xf]
    %v268 = vld [vmem:[#allocation8 + $0x8] sm:$0xf]
    %v269 = vld [vmem:[#allocation8 + $0xc] sm:$0xf]
    %v270 = vld [vmem:[#allocation8 + $0x10] sm:$0xf]
    %v271 = vld [vmem:[#allocation8 + $0x14] sm:$0xf]
    %v272 = vld [vmem:[#allocation8 + $0x18] sm:$0xf]
    %v273 = vld [vmem:[#allocation8 + $0x1c] sm:$0xf]
    %v274 = vld [vmem:[#allocation8 + $0x20] sm:$0xf]
    %v275 = vld [vmem:[#allocation8 + $0x24] sm:$0xf]
    %v276 = vld [vmem:[#allocation8 + $0x28] sm:$0xf]
    %v277 = vld [vmem:[#allocation8 + $0x2c] sm:$0xf]
    %v278 = vld [vmem:[#allocation8 + $0x30] sm:$0xf]
    %v279 = vld [vmem:[#allocation8 + $0x34] sm:$0xf]
    %v280 = vld [vmem:[#allocation8 + $0x38] sm:$0xf]
    %v281 = vld [vmem:[#allocation8 + $0x3c] sm:$0xf]
    %v282 = vld [vmem:[#allocation10] sm:$0x1]
    %v284 = vlaneseq
    %v285 = vshrl.u32 %v284, 7
    %v286 = vsub.s32 0, %v285
    %v287 = vrot.slane %v282, %v286
    %v305 = vunpack.c.l.b16 %v266
    %v306 = vunpack.c.l.b16 %v267
    %v307 = vunpack.c.l.b16 %v268
    %v308 = vunpack.c.l.b16 %v269
    %v309 = vunpack.c.l.b16 %v270
    %v310 = vunpack.c.l.b16 %v271
    %v311 = vunpack.c.l.b16 %v272
    %v312 = vunpack.c.l.b16 %v273
    %v313 = vunpack.c.l.b16 %v274
    %v314 = vunpack.c.l.b16 %v275
    %v315 = vunpack.c.l.b16 %v276
    %v316 = vunpack.c.l.b16 %v277
    %v317 = vunpack.c.l.b16 %v278
    %v318 = vunpack.c.l.b16 %v279
    %v319 = vunpack.c.l.b16 %v280
    %v320 = vunpack.c.l.b16 %v281
    %v321 = vpack.c.b16 %v306, %v305
    %v322 = vpack.c.b16 %v308, %v307
    %v323 = vpack.c.b16 %v310, %v309
    %v324 = vpack.c.b16 %v312, %v311
    %v325 = vpack.c.b16 %v314, %v313
    %v326 = vpack.c.b16 %v316, %v315
    %v327 = vpack.c.b16 %v318, %v317
    %v328 = vpack.c.b16 %v320, %v319
    %337 = vmatprep.subr.bf16.mxu0 0
    %338 = vmatpush1.bf16.msra.mxu0 %v321
    %339 = vmatprep.subr.bf16.mxu0 0
    %340 = vmatpush1.bf16.msra.mxu0 %v322
    %341 = vmatprep.subr.bf16.mxu0 0
    %342 = vmatpush1.bf16.msra.mxu0 %v323
    %343 = vmatprep.subr.bf16.mxu0 0
    %344 = vmatpush1.bf16.msra.mxu0 %v324
    %345 = vmatprep.subr.bf16.mxu0 0
    %346 = vmatpush1.bf16.msra.mxu0 %v325
    %347 = vmatprep.subr.bf16.mxu0 0
    %348 = vmatpush1.bf16.msra.mxu0 %v326
    %349 = vmatprep.subr.bf16.mxu0 0
    %350 = vmatpush1.bf16.msra.mxu0 %v327
    %351 = vmatprep.subr.bf16.mxu0 0
    %352 = vmatpush1.bf16.msra.mxu0 %v328
    %353 = vmatprep.subr.bf16.mxu0 0
    %354 = vmatpush1.bf16.msra.mxu0 0
    %355 = vmatprep.subr.bf16.mxu0 0
    %356 = vmatpush1.bf16.msra.mxu0 0
    %357 = vmatprep.subr.bf16.mxu0 0
    %358 = vmatpush1.bf16.msra.mxu0 0
    %359 = vmatprep.subr.bf16.mxu0 0
    %360 = vmatpush1.bf16.msra.mxu0 0
    %361 = vmatprep.subr.bf16.mxu0 0
    %362 = vmatpush1.bf16.msra.mxu0 0
    %363 = vmatprep.subr.bf16.mxu0 0
    %364 = vmatpush1.bf16.msra.mxu0 0
    %365 = vmatprep.subr.bf16.mxu0 0
    %366 = vmatpush1.bf16.msra.mxu0 0
    %367 = vmatprep.subr.bf16.mxu0 0
    %368 = vmatpush1.bf16.msra.mxu0 0
    %369 = vmatprep.mubr.bf16.mxu0 0
    %370 = vmatmul.mubr.bf16.gmra.mrb[0].mxu0 %v265
    %v371 = vpop.f32.mrb[0].mxu0
    %v372 = vadd.f32 %v287, %v371
    %v373 = vpop.f32.mrb[0].mxu0
    %v374 = vpop.f32.mrb[0].mxu0
    %v375 = vadd.f32 %v287, %v374
    %v376 = vpop.f32.mrb[0].mxu0
    %377 = vdwg.mxu0
    %378 = vset.pattern.permute.xlu0 2
    %379 = vperm.xlu0 %378, %v103
    %v380 = vpop.permute.xlu0 %379
    %382 = vset.pattern.permute.xlu0 2
    %383 = vperm.xlu0 %382, %v104
    %v384 = vpop.permute.xlu0 %383
    %v386 = vmul.f32 %v372, %v380
    %v387 = vmul.f32 %v375, %v384
    %388 = vset.pattern.permute.xlu0 3
    %389 = vperm.xlu0 %388, %v103
    %v390 = vpop.permute.xlu0 %389
    %392 = vset.pattern.permute.xlu0 3
    %393 = vperm.xlu0 %392, %v104
    %v394 = vpop.permute.xlu0 %393
    %v396 = vadd.f32 %v386, %v390
    %v397 = vadd.f32 %v387, %v394
    %v398 = vpack.c.bf16 %v397, %v396
    %v400 = vunpack.c.l.b16 %v398
    %v401 = vunpack.c.h.b16 %v398
    %v402 = vpack.c.b16 %v400, %v400
    %v403 = vpack.c.b16 %v401, %v401
    %406 = vst [vmem:[#allocation13] sm:$0xf] %v402
    %407 = vst [vmem:[#allocation13 + $0x4] sm:$0xf] %v403
    // Predicated region
    $region50: #{tpu_custom_call.1} parent=1 // pred_check
      _
    $region51: #{tpu_custom_call.1} parent=1 // pred_check_branch
      %409 = sbr.rel (0) target = $region53
    $region52: #{tpu_custom_call.1} parent=1 // pred_region
      %s411 = ssub.s32 128, 128
      %412 = vsyncadd [#allocation4], %s411
      %s413 = sshll.u32 [#allocation13], 4
      %s414 = int_to_ptr.vmem [resolvable:$true] %s413
      %419 = dma.vmem_to_hbm [thread:$0]  %s414, 128, %s6, [#allocation4], 64, 64, 4
    $region53: #{tpu_custom_call.1} parent=1 // pred_fallthru
      _
    // Predicated region
    $region54: #{tpu_custom_call.1} parent=1 // pred_check
      _
    $region55: #{tpu_custom_call.1} parent=1 // pred_check_branch
      %421 = sbr.rel (0) target = $region57
    $region56: #{tpu_custom_call.1} parent=1 // pred_region
      %422 = dma.done [#allocation4], 128
    $region57: #{tpu_custom_call.1} parent=1 // pred_fallthru
      _
    %423 = vsyncpa [#allocation3], 1
    %424 = vsyncpa [#allocation6], 1
    %425 = vsyncpa [#allocation9], 1
    %426 = vsyncpa [#allocation12], 1
    %427 = vsyncpa [#allocation4], 1

// kernel: tpu_custom_call.1
$region0: #{tpu_custom_call.1}
  #allocation0 [shape = 'u32[]', space=smem, size = 0x4, offset = 0x4, fixed_abs, tag = 'smem constant byte address 0x4 - core index']
  #allocation1 [shape = 'u32[144,128]{1,0:T(1,128)}', space=vmem, size = 0x12000, scoped, tag = 'internal scratch']
  %s0 = inlined_call_operand.hbm [shape: bf16[16,128], index: 0, kind: input, shape index: {}]
  %s1 = inlined_call_operand.hbm [shape: bf16[128,128], index: 1, kind: input, shape index: {}]
  %s2 = inlined_call_operand.hbm [shape: f32[1,128], index: 2, kind: input, shape index: {}]
  %s3 = inlined_call_operand.hbm [shape: bf16[128,128], index: 3, kind: input, shape index: {}]
  %s4 = inlined_call_operand.hbm [shape: f32[1,128], index: 4, kind: input, shape index: {}]
  %s5 = inlined_call_operand.hbm [shape: f32[16,4], index: 5, kind: input, shape index: {}]
  %s6 = inlined_call_operand.hbm [shape: bf16[16,128], index: 6, kind: output, shape index: {}]
  %s7 = sld [smem:[#allocation0]]
  $region58: #{tpu_custom_call.1} parent=0
    _
  %s9 = ssub.s32 1, %s7
  %s10 = scalar_select 0, %s9, %s7
  $region1: #{tpu_custom_call.1} parent=0
    #allocation2 [shape = 'u8[4096]{0}', space=vmem, size = 0x1000, scoped, tag = 'input window, operand 0, single buffered']
    #allocation3 [shape = 's32[1]{0}', space=sflag, size = 0x4, scoped, tag = 'scoped memory for tpu_custom_call.1']
    #allocation4 [shape = 's32[1]{0}', space=sflag, size = 0x4, scoped, tag = 'scoped memory for tpu_custom_call.1']
    #allocation5 [shape = 'u8[32768]{0}', space=vmem, size = 0x8000, scoped, tag = 'input window, operand 1, single buffered']
    #allocation6 [shape = 's32[1]{0}', space=sflag, size = 0x4, scoped, tag = 'scoped memory for tpu_custom_call.1']
    #allocation7 [shape = 'u8[512]{0}', space=vmem, size = 0x400, scoped, tag = 'input window, operand 2, single buffered']
    #allocation8 [shape = 'u8[32768]{0}', space=vmem, size = 0x8000, scoped, tag = 'input window, operand 3, single buffered']
    #allocation9 [shape = 's32[1]{0}', space=sflag, size = 0x4, scoped, tag = 'scoped memory for tpu_custom_call.1']
    #allocation10 [shape = 'u8[512]{0}', space=vmem, size = 0x400, scoped, tag = 'input window, operand 4, single buffered']
    #allocation11 [shape = 'u8[8192]{0}', space=vmem, size = 0x2000, scoped, tag = 'input window, operand 5, single buffered']
    #allocation12 [shape = 's32[1]{0}', space=sflag, size = 0x4, scoped, tag = 'scoped memory for tpu_custom_call.1']
    #allocation13 [shape = 'u8[4096]{0}', space=vmem, size = 0x1000, scoped, tag = 'output window, operand 0, single buffered']
    %11 = vsyncpa [#allocation3], 0
    %12 = vsyncpa [#allocation6], 0
    %13 = vsyncpa [#allocation9], 0
    %14 = vsyncpa [#allocation12], 0
    %15 = vsyncpa [#allocation4], 0
    // Predicated region
    $region2: #{tpu_custom_call.1} parent=1 // pred_check
      _
    $region3: #{tpu_custom_call.1} parent=1 // pred_check_branch
      %17 = sbr.rel (0) target = $region5
    $region4: #{tpu_custom_call.1} parent=1 // pred_region
      %s19 = ssub.s32 128, 128
      %20 = vsyncadd [#allocation3], %s19
      %s21 = sshll.u32 [#allocation2], 4
      %s22 = int_to_ptr.vmem [resolvable:$true] %s21
      %27 = dma.hbm_to_vmem [thread:$0]  %s0, 128, %s22, [#allocation3], 64, 64, 4
    $region5: #{tpu_custom_call.1} parent=1 // pred_fallthru
      _
    // Predicated region
    $region6: #{tpu_custom_call.1} parent=1 // pred_check
      _
    $region7: #{tpu_custom_call.1} parent=1 // pred_check_branch
      %29 = sbr.rel (0) target = $region9
    $region8: #{tpu_custom_call.1} parent=1 // pred_region
      %s31 = ssub.s32 1024, 1024
      %32 = vsyncadd [#allocation6], %s31
      %s33 = sshll.u32 [#allocation5], 4
      %s34 = int_to_ptr.vmem [resolvable:$true] %s33
      %39 = dma.hbm_to_vmem [thread:$0]  %s1, 1024, %s34, [#allocation6], 64, 64, 4
    $region9: #{tpu_custom_call.1} parent=1 // pred_fallthru
      _
    // Predicated region
    $region10: #{tpu_custom_call.1} parent=1 // pred_check
      _
    $region11: #{tpu_custom_call.1} parent=1 // pred_check_branch
      %41 = sbr.rel (0) target = $region13
    $region12: #{tpu_custom_call.1} parent=1 // pred_region
      %s43 = ssub.s32 16, 16
      %44 = vsyncadd [#allocation6], %s43
      %s46 = sshll.u32 [#allocation7], 4
      %s47 = int_to_ptr.vmem [resolvable:$true] %s46
      %49 = dma.hbm_to_vmem [thread:$0]  %s2, 16, %s47, [#allocation6]
    $region13: #{tpu_custom_call.1} parent=1 // pred_fallthru
      _
    // Predicated region
    $region14: #{tpu_custom_call.1} parent=1 // pred_check
      _
    $region15: #{tpu_custom_call.1} parent=1 // pred_check_branch
      %51 = sbr.rel (0) target = $region17
    $region16: #{tpu_custom_call.1} parent=1 // pred_region
      %s53 = ssub.s32 1024, 1024
      %54 = vsyncadd [#allocation9], %s53
      %s55 = sshll.u32 [#allocation8], 4
      %s56 = int_to_ptr.vmem [resolvable:$true] %s55
      %61 = dma.hbm_to_vmem [thread:$0]  %s3, 1024, %s56, [#allocation9], 64, 64, 4
    $region17: #{tpu_custom_call.1} parent=1 // pred_fallthru
      _
    // Predicated region
    $region18: #{tpu_custom_call.1} parent=1 // pred_check
      _
    $region19: #{tpu_custom_call.1} parent=1 // pred_check_branch
      %63 = sbr.rel (0) target = $region21
    $region20: #{tpu_custom_call.1} parent=1 // pred_region
      %s65 = ssub.s32 16, 16
      %66 = vsyncadd [#allocation9], %s65
      %s68 = sshll.u32 [#allocation10], 4
      %s69 = int_to_ptr.vmem [resolvable:$true] %s68
      %71 = dma.hbm_to_vmem [thread:$0]  %s4, 16, %s69, [#allocation9]
    $region21: #{tpu_custom_call.1} parent=1 // pred_fallthru
      _
    // Predicated region
    $region22: #{tpu_custom_call.1} parent=1 // pred_check
      _
    $region23: #{tpu_custom_call.1} parent=1 // pred_check_branch
      %73 = sbr.rel (0) target = $region25
    $region24: #{tpu_custom_call.1} parent=1 // pred_region
      %s75 = ssub.s32 256, 256
      %76 = vsyncadd [#allocation12], %s75
      %s77 = sshll.u32 [#allocation11], 4
      %s78 = int_to_ptr.vmem [resolvable:$true] %s77
      %83 = dma.hbm_to_vmem [thread:$0]  %s5, 256, %s78, [#allocation12], 128, 128, 8
    $region25: #{tpu_custom_call.1} parent=1 // pred_fallthru
      _
    // Predicated region
    $region26: #{tpu_custom_call.1} parent=1 // pred_check
      _
    $region27: #{tpu_custom_call.1} parent=1 // pred_check_branch
      %85 = sbr.rel (0) target = $region29
    $region28: #{tpu_custom_call.1} parent=1 // pred_region
      %86 = dma.done [#allocation3], 128
    $region29: #{tpu_custom_call.1} parent=1 // pred_fallthru
      _
    // Predicated region
    $region30: #{tpu_custom_call.1} parent=1 // pred_check
      _
    $region31: #{tpu_custom_call.1} parent=1 // pred_check_branch
      %88 = sbr.rel (0) target = $region33
    $region32: #{tpu_custom_call.1} parent=1 // pred_region
      %89 = dma.done [#allocation6], 1024
    $region33: #{tpu_custom_call.1} parent=1 // pred_fallthru
      _
    // Predicated region
    $region34: #{tpu_custom_call.1} parent=1 // pred_check
      _
    $region35: #{tpu_custom_call.1} parent=1 // pred_check_branch
      %91 = sbr.rel (0) target = $region37
    $region36: #{tpu_custom_call.1} parent=1 // pred_region
      %92 = dma.done [#allocation6], 16
    $region37: #{tpu_custom_call.1} parent=1 // pred_fallthru
      _
    // Predicated region
    $region38: #{tpu_custom_call.1} parent=1 // pred_check
      _
    $region39: #{tpu_custom_call.1} parent=1 // pred_check_branch
      %94 = sbr.rel (0) target = $region41
    $region40: #{tpu_custom_call.1} parent=1 // pred_region
      %95 = dma.done [#allocation9], 1024
    $region41: #{tpu_custom_call.1} parent=1 // pred_fallthru
      _
    // Predicated region
    $region42: #{tpu_custom_call.1} parent=1 // pred_check
      _
    $region43: #{tpu_custom_call.1} parent=1 // pred_check_branch
      %97 = sbr.rel (0) target = $region45
    $region44: #{tpu_custom_call.1} parent=1 // pred_region
      %98 = dma.done [#allocation9], 16
    $region45: #{tpu_custom_call.1} parent=1 // pred_fallthru
      _
    // Predicated region
    $region46: #{tpu_custom_call.1} parent=1 // pred_check
      _
    $region47: #{tpu_custom_call.1} parent=1 // pred_check_branch
      %100 = sbr.rel (0) target = $region49
    $region48: #{tpu_custom_call.1} parent=1 // pred_region
      %101 = dma.done [#allocation12], 256
    $region49: #{tpu_custom_call.1} parent=1 // pred_fallthru
      _
    %v103 = vld [vmem:[#allocation11] sm:$0xff]
    %v104 = vld [vmem:[#allocation11 + $0x8] sm:$0xff]
    %v105 = vld [vmem:[#allocation2] sm:$0xf]
    %v106 = vld [vmem:[#allocation2 + $0x4] sm:$0xf]
    %v107 = vld [vmem:[#allocation5] sm:$0xf]
    %v108 = vld [vmem:[#allocation5 + $0x4] sm:$0xf]
    %v109 = vld [vmem:[#allocation5 + $0x8] sm:$0xf]
    %v110 = vld [vmem:[#allocation5 + $0xc] sm:$0xf]
    %v111 = vld [vmem:[#allocation5 + $0x10] sm:$0xf]
    %v112 = vld [vmem:[#allocation5 + $0x14] sm:$0xf]
    %v113 = vld [vmem:[#allocation5 + $0x18] sm:$0xf]
    %v114 = vld [vmem:[#allocation5 + $0x1c] sm:$0xf]
    %v115 = vld [vmem:[#allocation5 + $0x20] sm:$0xf]
    %v116 = vld [vmem:[#allocation5 + $0x24] sm:$0xf]
    %v117 = vld [vmem:[#allocation5 + $0x28] sm:$0xf]
    %v118 = vld [vmem:[#allocation5 + $0x2c] sm:$0xf]
    %v119 = vld [vmem:[#allocation5 + $0x30] sm:$0xf]
    %v120 = vld [vmem:[#allocation5 + $0x34] sm:$0xf]
    %v121 = vld [vmem:[#allocation5 + $0x38] sm:$0xf]
    %v122 = vld [vmem:[#allocation5 + $0x3c] sm:$0xf]
    %v123 = vld [vmem:[#allocation7] sm:$0x1]
    %v125 = vlaneseq
    %v126 = vshrl.u32 %v125, 7
    %v127 = vsub.s32 0, %v126
    %v128 = vrot.slane %v123, %v127
    %v132 = vunpack.c.l.b16 %v105
    %v133 = vunpack.c.l.b16 %v106
    %v134 = vpack.c.b16 %v133, %v132
    %v152 = vunpack.c.l.b16 %v107
    %v153 = vunpack.c.l.b16 %v108
    %v154 = vunpack.c.l.b16 %v109
    %v155 = vunpack.c.l.b16 %v110
    %v156 = vunpack.c.l.b16 %v111
    %v157 = vunpack.c.l.b16 %v112
    %v158 = vunpack.c.l.b16 %v113
    %v159 = vunpack.c.l.b16 %v114
    %v160 = vunpack.c.l.b16 %v115
    %v161 = vunpack.c.l.b16 %v116
    %v162 = vunpack.c.l.b16 %v117
    %v163 = vunpack.c.l.b16 %v118
    %v164 = vunpack.c.l.b16 %v119
    %v165 = vunpack.c.l.b16 %v120
    %v166 = vunpack.c.l.b16 %v121
    %v167 = vunpack.c.l.b16 %v122
    %v168 = vpack.c.b16 %v153, %v152
    %v169 = vpack.c.b16 %v155, %v154
    %v170 = vpack.c.b16 %v157, %v156
    %v171 = vpack.c.b16 %v159, %v158
    %v172 = vpack.c.b16 %v161, %v160
    %v173 = vpack.c.b16 %v163, %v162
    %v174 = vpack.c.b16 %v165, %v164
    %v175 = vpack.c.b16 %v167, %v166
    %184 = vmatprep.subr.bf16.mxu0 0
    %185 = vmatpush1.bf16.msra.mxu0 %v168
    %186 = vmatprep.subr.bf16.mxu0 0
    %187 = vmatpush1.bf16.msra.mxu0 %v169
    %188 = vmatprep.subr.bf16.mxu0 0
    %189 = vmatpush1.bf16.msra.mxu0 %v170
    %190 = vmatprep.subr.bf16.mxu0 0
    %191 = vmatpush1.bf16.msra.mxu0 %v171
    %192 = vmatprep.subr.bf16.mxu0 0
    %193 = vmatpush1.bf16.msra.mxu0 %v172
    %194 = vmatprep.subr.bf16.mxu0 0
    %195 = vmatpush1.bf16.msra.mxu0 %v173
    %196 = vmatprep.subr.bf16.mxu0 0
    %197 = vmatpush1.bf16.msra.mxu0 %v174
    %198 = vmatprep.subr.bf16.mxu0 0
    %199 = vmatpush1.bf16.msra.mxu0 %v175
    %200 = vmatprep.subr.bf16.mxu0 0
    %201 = vmatpush1.bf16.msra.mxu0 0
    %202 = vmatprep.subr.bf16.mxu0 0
    %203 = vmatpush1.bf16.msra.mxu0 0
    %204 = vmatprep.subr.bf16.mxu0 0
    %205 = vmatpush1.bf16.msra.mxu0 0
    %206 = vmatprep.subr.bf16.mxu0 0
    %207 = vmatpush1.bf16.msra.mxu0 0
    %208 = vmatprep.subr.bf16.mxu0 0
    %209 = vmatpush1.bf16.msra.mxu0 0
    %210 = vmatprep.subr.bf16.mxu0 0
    %211 = vmatpush1.bf16.msra.mxu0 0
    %212 = vmatprep.subr.bf16.mxu0 0
    %213 = vmatpush1.bf16.msra.mxu0 0
    %214 = vmatprep.subr.bf16.mxu0 0
    %215 = vmatpush1.bf16.msra.mxu0 0
    %216 = vmatprep.mubr.bf16.mxu0 0
    %217 = vmatmul.mubr.bf16.gmra.mrb[0].mxu0 %v134
    %v218 = vpop.f32.mrb[0].mxu0
    %v219 = vadd.f32 %v128, %v218
    %v220 = vpop.f32.mrb[0].mxu0
    %v221 = vpop.f32.mrb[0].mxu0
    %v222 = vadd.f32 %v128, %v221
    %v223 = vpop.f32.mrb[0].mxu0
    %224 = vdwg.mxu0
    %226 = vset.pattern.permute.xlu0 0
    %227 = vperm.xlu0 %226, %v103
    %v228 = vpop.permute.xlu0 %227
    %231 = vset.pattern.permute.xlu0 0
    %232 = vperm.xlu0 %231, %v104
    %v233 = vpop.permute.xlu0 %232
    %v235 = vmul.f32 %v219, %v228
    %v236 = vmul.f32 %v222, %v233
    %237 = vset.pattern.permute.xlu0 1
    %238 = vperm.xlu0 %237, %v103
    %v239 = vpop.permute.xlu0 %238
    %241 = vset.pattern.permute.xlu0 1
    %242 = vperm.xlu0 %241, %v104
    %v243 = vpop.permute.xlu0 %242
    %v245 = vadd.f32 %v235, %v239
    %v246 = vadd.f32 %v236, %v243
    %v247 = vmul.f32 %v245, 0.7978846
    %v248 = vmul.f32 %v246, 0.7978846
    %v249 = vmul.f32 %v245, %v245
    %v250 = vmul.f32 %v246, %v246
    %v251 = vmul.f32 %v249, 0.044715
    %v252 = vmul.f32 %v250, 0.044715
    %v253 = vadd.f32 %v251, 1.0
    %v254 = vadd.f32 %v252, 1.0
    %v255 = vmul.f32 %v247, %v253
    %v256 = vmul.f32 %v248, %v254
    %v257 = vmul.f32 %v245, 0.5
    %v258 = vmul.f32 %v246, 0.5
    %v259 = vtanh.pop %v255
    %v260 = vtanh.pop %v256
    %v261 = vadd.f32 %v259, 1.0
    %v262 = vadd.f32 %v260, 1.0
    %v263 = vmul.f32 %v257, %v261
    %v264 = vmul.f32 %v258, %v262
    %v265 = vpack.c.bf16 %v264, %v263
    %v266 = vld [vmem:[#allocation8] sm:$0xf]
    %v267 = vld [vmem:[#allocation8 + $0x4] sm:$0xf]
    %v268 = vld [vmem:[#allocation8 + $0x8] sm:$0xf]
    %v269 = vld [vmem:[#allocation8 + $0xc] sm:$0xf]
    %v270 = vld [vmem:[#allocation8 + $0x10] sm:$0xf]
    %v271 = vld [vmem:[#allocation8 + $0x14] sm:$0xf]
    %v272 = vld [vmem:[#allocation8 + $0x18] sm:$0xf]
    %v273 = vld [vmem:[#allocation8 + $0x1c] sm:$0xf]
    %v274 = vld [vmem:[#allocation8 + $0x20] sm:$0xf]
    %v275 = vld [vmem:[#allocation8 + $0x24] sm:$0xf]
    %v276 = vld [vmem:[#allocation8 + $0x28] sm:$0xf]
    %v277 = vld [vmem:[#allocation8 + $0x2c] sm:$0xf]
    %v278 = vld [vmem:[#allocation8 + $0x30] sm:$0xf]
    %v279 = vld [vmem:[#allocation8 + $0x34] sm:$0xf]
    %v280 = vld [vmem:[#allocation8 + $0x38] sm:$0xf]
    %v281 = vld [vmem:[#allocation8 + $0x3c] sm:$0xf]
    %v282 = vld [vmem:[#allocation10] sm:$0x1]
    %v284 = vlaneseq
    %v285 = vshrl.u32 %v284, 7
    %v286 = vsub.s32 0, %v285
    %v287 = vrot.slane %v282, %v286
    %v305 = vunpack.c.l.b16 %v266
    %v306 = vunpack.c.l.b16 %v267
    %v307 = vunpack.c.l.b16 %v268
    %v308 = vunpack.c.l.b16 %v269
    %v309 = vunpack.c.l.b16 %v270
    %v310 = vunpack.c.l.b16 %v271
    %v311 = vunpack.c.l.b16 %v272
    %v312 = vunpack.c.l.b16 %v273
    %v313 = vunpack.c.l.b16 %v274
    %v314 = vunpack.c.l.b16 %v275
    %v315 = vunpack.c.l.b16 %v276
    %v316 = vunpack.c.l.b16 %v277
    %v317 = vunpack.c.l.b16 %v278
    %v318 = vunpack.c.l.b16 %v279
    %v319 = vunpack.c.l.b16 %v280
    %v320 = vunpack.c.l.b16 %v281
    %v321 = vpack.c.b16 %v306, %v305
    %v322 = vpack.c.b16 %v308, %v307
    %v323 = vpack.c.b16 %v310, %v309
    %v324 = vpack.c.b16 %v312, %v311
    %v325 = vpack.c.b16 %v314, %v313
    %v326 = vpack.c.b16 %v316, %v315
    %v327 = vpack.c.b16 %v318, %v317
    %v328 = vpack.c.b16 %v320, %v319
    %337 = vmatprep.subr.bf16.mxu0 0
    %338 = vmatpush1.bf16.msra.mxu0 %v321
    %339 = vmatprep.subr.bf16.mxu0 0
    %340 = vmatpush1.bf16.msra.mxu0 %v322
    %341 = vmatprep.subr.bf16.mxu0 0
    %342 = vmatpush1.bf16.msra.mxu0 %v323
    %343 = vmatprep.subr.bf16.mxu0 0
    %344 = vmatpush1.bf16.msra.mxu0 %v324
    %345 = vmatprep.subr.bf16.mxu0 0
    %346 = vmatpush1.bf16.msra.mxu0 %v325
    %347 = vmatprep.subr.bf16.mxu0 0
    %348 = vmatpush1.bf16.msra.mxu0 %v326
    %349 = vmatprep.subr.bf16.mxu0 0
    %350 = vmatpush1.bf16.msra.mxu0 %v327
    %351 = vmatprep.subr.bf16.mxu0 0
    %352 = vmatpush1.bf16.msra.mxu0 %v328
    %353 = vmatprep.subr.bf16.mxu0 0
    %354 = vmatpush1.bf16.msra.mxu0 0
    %355 = vmatprep.subr.bf16.mxu0 0
    %356 = vmatpush1.bf16.msra.mxu0 0
    %357 = vmatprep.subr.bf16.mxu0 0
    %358 = vmatpush1.bf16.msra.mxu0 0
    %359 = vmatprep.subr.bf16.mxu0 0
    %360 = vmatpush1.bf16.msra.mxu0 0
    %361 = vmatprep.subr.bf16.mxu0 0
    %362 = vmatpush1.bf16.msra.mxu0 0
    %363 = vmatprep.subr.bf16.mxu0 0
    %364 = vmatpush1.bf16.msra.mxu0 0
    %365 = vmatprep.subr.bf16.mxu0 0
    %366 = vmatpush1.bf16.msra.mxu0 0
    %367 = vmatprep.subr.bf16.mxu0 0
    %368 = vmatpush1.bf16.msra.mxu0 0
    %369 = vmatprep.mubr.bf16.mxu0 0
    %370 = vmatmul.mubr.bf16.gmra.mrb[0].mxu0 %v265
    %v371 = vpop.f32.mrb[0].mxu0
    %v372 = vadd.f32 %v287, %v371
    %v373 = vpop.f32.mrb[0].mxu0
    %v374 = vpop.f32.mrb[0].mxu0
    %v375 = vadd.f32 %v287, %v374
    %v376 = vpop.f32.mrb[0].mxu0
    %377 = vdwg.mxu0
    %378 = vset.pattern.permute.xlu0 2
    %379 = vperm.xlu0 %378, %v103
    %v380 = vpop.permute.xlu0 %379
    %382 = vset.pattern.permute.xlu0 2
    %383 = vperm.xlu0 %382, %v104
    %v384 = vpop.permute.xlu0 %383
    %v386 = vmul.f32 %v372, %v380
    %v387 = vmul.f32 %v375, %v384
    %388 = vset.pattern.permute.xlu0 3
    %389 = vperm.xlu0 %388, %v103
    %v390 = vpop.permute.xlu0 %389
    %392 = vset.pattern.permute.xlu0 3
    %393 = vperm.xlu0 %392, %v104
    %v394 = vpop.permute.xlu0 %393
    %v396 = vadd.f32 %v386, %v390
    %v397 = vadd.f32 %v387, %v394
    %v398 = vpack.c.bf16 %v397, %v396
    %v400 = vunpack.c.l.b16 %v398
    %v401 = vunpack.c.h.b16 %v398
    %v402 = vpack.c.b16 %v400, %v400
    %v403 = vpack.c.b16 %v401, %v401
    %406 = vst [vmem:[#allocation13] sm:$0xf] %v402
    %407 = vst [vmem:[#allocation13 + $0x4] sm:$0xf] %v403
    // Predicated region
    $region50: #{tpu_custom_call.1} parent=1 // pred_check
      _
    $region51: #{tpu_custom_call.1} parent=1 // pred_check_branch
      %409 = sbr.rel (0) target = $region53
    $region52: #{tpu_custom_call.1} parent=1 // pred_region
      %s411 = ssub.s32 128, 128
      %412 = vsyncadd [#allocation4], %s411
      %s413 = sshll.u32 [#allocation13], 4
      %s414 = int_to_ptr.vmem [resolvable:$true] %s413
      %419 = dma.vmem_to_hbm [thread:$0]  %s414, 128, %s6, [#allocation4], 64, 64, 4
    $region53: #{tpu_custom_call.1} parent=1 // pred_fallthru
      _
    // Predicated region
    $region54: #{tpu_custom_call.1} parent=1 // pred_check
      _
    $region55: #{tpu_custom_call.1} parent=1 // pred_check_branch
      %421 = sbr.rel (0) target = $region57
    $region56: #{tpu_custom_call.1} parent=1 // pred_region
      %422 = dma.done [#allocation4], 128
    $region57: #{tpu_custom_call.1} parent=1 // pred_fallthru
      _
    %423 = vsyncpa [#allocation3], 1
    %424 = vsyncpa [#allocation6], 1
    %425 = vsyncpa [#allocation9], 1
    %426 = vsyncpa [#allocation12], 1
    %427 = vsyncpa [#allocation4], 1

</llo_original>
